<compile_context>
chip_gen: v7x
topology: tpu7x:2x2x1
jax: 0.10.0
libtpu: 0.0.40
codegen_flags: <defaults>
</compile_context>

<pallas_src>
import functools
import math

import jax
import jax.numpy as jnp
from jax import lax
from jax.experimental import pallas as pl
from jax.experimental.pallas import tpu as pltpu

LANES = 128
CHUNK_ROWS = 64                 # rows reduced per inner-loop step (8 f32 vregs / operand)
TARGET_INPUT_BYTES = 8 << 20    # combined bytes (both operands) per pipeline buffer (~4 MiB each)
VMEM_LIMIT_BYTES = 32 << 20     # safe on v5e/v6e (128 MiB phys) and v7x (64 MiB phys)


def _dice_kernel(rows, block_rows, chunk_rows, needs_mask,
                 x_ref, t_ref, out_ref, inter_acc, sums_acc):
    b = pl.program_id(0)  # reduction step (block index)

    # Zero the resident accumulators on the first step.
    @pl.when(b == 0)
    def _():
        inter_acc[...] = jnp.zeros_like(inter_acc)
        sums_acc[...] = jnp.zeros_like(sums_acc)

    n_chunks = block_rows // chunk_rows
    unroll = math.gcd(n_chunks, 8)          # always divides the trip count
    zeros = jnp.zeros((8, LANES), jnp.float32)

    def load_chunk(c):
        # Native-dtype slab load, cast per chunk on the VPU (hidden under DMA).
        r0 = pl.multiple_of(c * chunk_rows, chunk_rows)
        x = x_ref[pl.ds(r0, chunk_rows), :].astype(jnp.float32)
        t = t_ref[pl.ds(r0, chunk_rows), :].astype(jnp.float32)
        return x, t

    def accumulate(x, t, carry):
        # Keep reductions vreg-shaped: (chunk_rows//8, 8, 128) summed over the
        # leading axis is a short tree of in-register VPU adds.
        ia, sa = carry
        xw = x.reshape(chunk_rows // 8, 8, LANES)
        tw = t.reshape(chunk_rows // 8, 8, LANES)
        ia = ia + jnp.sum(xw * tw, axis=0)
        sa = sa + jnp.sum(xw + tw, axis=0)   # fused union term: sum(x + t)
        return ia, sa

    def fast_body(c, carry):
        x, t = load_chunk(c)
        return accumulate(x, t, carry)

    def run_fast():
        ia, sa = lax.fori_loop(0, n_chunks, fast_body, (zeros, zeros), unroll=unroll)
        inter_acc[...] += ia
        sums_acc[...] += sa

    if needs_mask:
        valid = rows - b * block_rows        # valid rows in this block

        def masked_body(c, carry):
            x, t = load_chunk(c)
            row = lax.broadcasted_iota(jnp.int32, (chunk_rows, 1), 0) + c * chunk_rows
            keep = row < valid
            # Zero BEFORE any arithmetic: pad rows hold undefined data.
            x = jnp.where(keep, x, 0.0)
            t = jnp.where(keep, t, 0.0)
            return accumulate(x, t, carry)

        @pl.when(valid >= block_rows)        # every full block: unmasked fast path
        def _():
            run_fast()

        @pl.when(valid < block_rows)         # only the single boundary block
        def _():
            ia, sa = lax.fori_loop(0, n_chunks, masked_body, (zeros, zeros),
                                   unroll=unroll)
            inter_acc[...] += ia
            sums_acc[...] += sa
    else:
        run_fast()

    # Epilogue: fold the cross-lane reduction into the kernel (XLU is a free
    # slot here) and emit two scalars to SMEM.
    @pl.when(b == pl.num_programs(0) - 1)
    def _():
        out_ref[0, 0] = jnp.sum(inter_acc[...])
        out_ref[0, 1] = jnp.sum(sums_acc[...])


def dice_loss(inputs, targets, smooth=1.0):
    """Pallas TPU implementation of DiceLoss.forward. Returns a scalar f32."""
    assert inputs.shape == targets.shape
    x = inputs.reshape(-1)
    t = targets.reshape(-1)
    total = x.shape[0]

    rows = total // LANES
    n_main = rows * LANES

    if n_main == total:
        x_main, t_main = x, t
        tail_inter = jnp.float32(0.0)
        tail_sums = jnp.float32(0.0)
    else:
        # Lane tail (< 128 elements): reduce directly instead of padding /
        # rewriting the full arrays in HBM.
        x_main, t_main = x[:n_main], t[:n_main]
        xt = x[n_main:].astype(jnp.float32)
        tt = t[n_main:].astype(jnp.float32)
        tail_inter = jnp.sum(xt * tt)
        tail_sums = jnp.sum(xt) + jnp.sum(tt)

    if rows < 8:
        # Too small to tile onto (8, 128) vregs -- plain reduction is cheaper.
        xf = x_main.astype(jnp.float32)
        tf = t_main.astype(jnp.float32)
        inter = jnp.sum(xf * tf) + tail_inter
        union = jnp.sum(xf) + jnp.sum(tf) + tail_sums
        return jnp.float32(1.0) - (2.0 * inter + smooth) / (union + smooth)

    x2 = x_main.reshape(rows, LANES)
    t2 = t_main.reshape(rows, LANES)

    # Dtype-aware block size: ~4 MiB per operand per pipeline buffer in the
    # NATIVE input dtype, rounded to a multiple of CHUNK_ROWS (64) so bf16 /
    # int8 sublane packing stays aligned.  block_rows never exceeds rows.
    bytes_per_row = LANES * (x2.dtype.itemsize + t2.dtype.itemsize)
    target_rows = max(CHUNK_ROWS,
                      (TARGET_INPUT_BYTES // bytes_per_row) // CHUNK_ROWS * CHUNK_ROWS)
    if rows >= CHUNK_ROWS:
        chunk_rows = CHUNK_ROWS
        block_rows = min(target_rows, (rows // CHUNK_ROWS) * CHUNK_ROWS)
    else:
        chunk_rows = 8
        block_rows = (rows // 8) * 8

    blocks_total = pl.cdiv(rows, block_rows)
    needs_mask = (rows % block_rows) != 0

    kernel = functools.partial(_dice_kernel, rows, block_rows, chunk_rows, needs_mask)

    partials = pl.pallas_call(
        kernel,
        out_shape=jax.ShapeDtypeStruct((1, 2), jnp.float32),
        grid_spec=pltpu.PrefetchScalarGridSpec(
            num_scalar_prefetch=0,
            grid=(blocks_total,),
            in_specs=[
                pl.BlockSpec((block_rows, LANES), lambda b: (b, 0)),
                pl.BlockSpec((block_rows, LANES), lambda b: (b, 0)),
            ],
            # Tiny scalar result lives in SMEM for the whole call; written once
            # at the last grid step.
            out_specs=pl.BlockSpec(memory_space=pltpu.MemorySpace.SMEM),
            scratch_shapes=[
                pltpu.VMEM((8, LANES), jnp.float32),   # intersection partials
                pltpu.VMEM((8, LANES), jnp.float32),   # sum(x) + sum(t) partials
            ],
        ),
        compiler_params=pltpu.CompilerParams(
            dimension_semantics=("arbitrary",),
            vmem_limit_bytes=VMEM_LIMIT_BYTES,
        ),
    )(x2, t2)

    inter = partials[0, 0] + tail_inter
    union = partials[0, 1] + tail_sums
    return jnp.float32(1.0) - (2.0 * inter + smooth) / (union + smooth)


def dice_loss_ref(inputs, targets, smooth=1.0):
    x = inputs.reshape(-1).astype(jnp.float32)
    t = targets.reshape(-1).astype(jnp.float32)
    inter = jnp.sum(x * t)
    union = jnp.sum(x) + jnp.sum(t)
    return 1.0 - (2.0 * inter + smooth) / (union + smooth)


if __name__ == "__main__":
    key = jax.random.PRNGKey(0)
    k1, k2, k3, k4, k5, k6 = jax.random.split(key, 6)

    # 1) NCHW sigmoid predictions vs. binary masks (lane-aligned, fast path).
    x = jax.nn.sigmoid(jax.random.normal(k1, (2, 4, 16, 16), dtype=jnp.float32))
    y = (jax.random.uniform(k2, (2, 4, 16, 16)) > 0.5).astype(jnp.float32)
    loss = jax.block_until_ready(dice_loss(x, y, smooth=1.0))
    ref = jax.block_until_ready(dice_loss_ref(x, y, smooth=1.0))
    assert jnp.allclose(loss, ref, rtol=1e-5, atol=1e-5), (loss, ref)

    # 2) Non-lane-aligned shape: masked boundary block + lane-tail path.
    x2 = jax.nn.sigmoid(jax.random.normal(k3, (2, 3, 17, 16), dtype=jnp.float32))
    y2 = (jax.random.uniform(k4, (2, 3, 17, 16)) > 0.5).astype(jnp.float32)
    loss2 = jax.block_until_ready(dice_loss(x2, y2, smooth=1.0))
    ref2 = jax.block_until_ready(dice_loss_ref(x2, y2, smooth=1.0))
    assert jnp.allclose(loss2, ref2, rtol=1e-5, atol=1e-5), (loss2, ref2)

    # 3) bf16 inputs, multi-block grid with a masked final block (dtype-aware
    #    block sizing + native-dtype streaming path).
    x3 = jax.nn.sigmoid(jax.random.normal(k5, (2, 4, 72, 100))).astype(jnp.bfloat16)
    y3 = (jax.random.uniform(k6, (2, 4, 72, 100)) > 0.5).astype(jnp.bfloat16)
    loss3 = jax.block_until_ready(dice_loss(x3, y3, smooth=1.0))
    ref3 = jax.block_until_ready(dice_loss_ref(x3, y3, smooth=1.0))
    assert jnp.allclose(loss3, ref3, rtol=1e-5, atol=1e-5), (loss3, ref3)

    print("KERNEL_OK")
</pallas_src>

<mosaic_0001>
module attributes {stable_mosaic.version = 11 : i64} {
  func.func @_dice_kernel(%arg0: i32, %arg1: memref<16x128xf32, #tpu.memory_space<vmem>>, %arg2: memref<16x128xf32, #tpu.memory_space<vmem>>, %arg3: memref<1x2xf32, #tpu.memory_space<smem>>, %arg4: memref<8x128xf32, #tpu.memory_space<vmem>>, %arg5: memref<8x128xf32, #tpu.memory_space<vmem>>) attributes {dimension_semantics = [#tpu.dimension_semantics<arbitrary>], iteration_bounds = array<i64: 1>, scalar_prefetch = 0 : i64, scratch_operands = 2 : i64, tpu.core_type = #tpu.core_type<tc>, window_params = [{transform_indices = @transform_0, window_bounds = array<i64: 16, 128>}, {transform_indices = @transform_1, window_bounds = array<i64: 16, 128>}, {transform_indices = @transform_2, window_bounds = array<i64: 1, 2>}]} {
    %c0_i32 = arith.constant 0 : i32
    %0 = arith.cmpi eq, %arg0, %c0_i32 : i32
    %1 = arith.extui %0 : i1 to i32
    %c0_i32_0 = arith.constant 0 : i32
    %2 = arith.cmpi ne, %1, %c0_i32_0 : i32
    scf.if %2 {
      %cst_20 = arith.constant 0.000000e+00 : f32
      %41 = vector.broadcast %cst_20 : f32 to vector<8x128xf32>
      %c0_21 = arith.constant 0 : index
      %c0_22 = arith.constant 0 : index
      %42 = vector.load %arg4[%c0_21, %c0_22] : memref<8x128xf32, #tpu.memory_space<vmem>>, vector<8x128xf32>
      tpu.vector_store %arg4[%c0_21, %c0_22], %41 {strides = array<i32>} : memref<8x128xf32, #tpu.memory_space<vmem>>, vector<8x128xf32>,
      %cst_23 = arith.constant 0.000000e+00 : f32
      %43 = vector.broadcast %cst_23 : f32 to vector<8x128xf32>
      %c0_24 = arith.constant 0 : index
      %c0_25 = arith.constant 0 : index
      %44 = vector.load %arg5[%c0_24, %c0_25] : memref<8x128xf32, #tpu.memory_space<vmem>>, vector<8x128xf32>
      tpu.vector_store %arg5[%c0_24, %c0_25], %43 {strides = array<i32>} : memref<8x128xf32, #tpu.memory_space<vmem>>, vector<8x128xf32>,
    } else {
    }
    %cst = arith.constant 0.000000e+00 : f32
    %3 = vector.broadcast %cst : f32 to vector<8x128xf32>
    %c0_i32_1 = arith.constant 0 : i32
    %c8_i32 = arith.constant 8 : i32
    %4 = arith.muli %c0_i32_1, %c8_i32 : i32
    %5 = tpu.assume_multiple %4, 8 : i32
    %6 = arith.index_cast %5 : i32 to index
    %c0 = arith.constant 0 : index
    %7 = vector.load %arg1[%6, %c0] : memref<16x128xf32, #tpu.memory_space<vmem>>, vector<8x128xf32>
    %8 = arith.index_cast %5 : i32 to index
    %c0_2 = arith.constant 0 : index
    %9 = vector.load %arg2[%8, %c0_2] : memref<16x128xf32, #tpu.memory_space<vmem>>, vector<8x128xf32>
    %10 = vector.shape_cast %7 : vector<8x128xf32> to vector<1x8x128xf32>
    %11 = vector.shape_cast %9 : vector<8x128xf32> to vector<1x8x128xf32>
    %12 = arith.mulf %10, %11 : vector<1x8x128xf32>
    %cst_3 = arith.constant dense<0.000000e+00> : vector<8x128xf32>
    %13 = vector.multi_reduction <add>, %12, %cst_3 [0] : vector<1x8x128xf32> to vector<8x128xf32>
    %14 = arith.addf %3, %13 : vector<8x128xf32>
    %15 = arith.addf %10, %11 : vector<1x8x128xf32>
    %cst_4 = arith.constant dense<0.000000e+00> : vector<8x128xf32>
    %16 = vector.multi_reduction <add>, %15, %cst_4 [0] : vector<1x8x128xf32> to vector<8x128xf32>
    %17 = arith.addf %3, %16 : vector<8x128xf32>
    %c1_i32 = arith.constant 1 : i32
    %c8_i32_5 = arith.constant 8 : i32
    %18 = arith.muli %c1_i32, %c8_i32_5 : i32
    %19 = tpu.assume_multiple %18, 8 : i32
    %20 = arith.index_cast %19 : i32 to index
    %c0_6 = arith.constant 0 : index
    %21 = vector.load %arg1[%20, %c0_6] : memref<16x128xf32, #tpu.memory_space<vmem>>, vector<8x128xf32>
    %22 = arith.index_cast %19 : i32 to index
    %c0_7 = arith.constant 0 : index
    %23 = vector.load %arg2[%22, %c0_7] : memref<16x128xf32, #tpu.memory_space<vmem>>, vector<8x128xf32>
    %24 = vector.shape_cast %21 : vector<8x128xf32> to vector<1x8x128xf32>
    %25 = vector.shape_cast %23 : vector<8x128xf32> to vector<1x8x128xf32>
    %26 = arith.mulf %24, %25 : vector<1x8x128xf32>
    %cst_8 = arith.constant dense<0.000000e+00> : vector<8x128xf32>
    %27 = vector.multi_reduction <add>, %26, %cst_8 [0] : vector<1x8x128xf32> to vector<8x128xf32>
    %28 = arith.addf %14, %27 : vector<8x128xf32>
    %29 = arith.addf %24, %25 : vector<1x8x128xf32>
    %cst_9 = arith.constant dense<0.000000e+00> : vector<8x128xf32>
    %30 = vector.multi_reduction <add>, %29, %cst_9 [0] : vector<1x8x128xf32> to vector<8x128xf32>
    %31 = arith.addf %17, %30 : vector<8x128xf32>
    %c2_i32 = arith.constant 2 : i32
    %c0_10 = arith.constant 0 : index
    %c0_11 = arith.constant 0 : index
    %32 = vector.load %arg4[%c0_10, %c0_11] : memref<8x128xf32, #tpu.memory_space<vmem>>, vector<8x128xf32>
    %33 = arith.addf %32, %28 : vector<8x128xf32>
    %c0_12 = arith.constant 0 : index
    %c0_13 = arith.constant 0 : index
    %34 = vector.load %arg4[%c0_12, %c0_13] : memref<8x128xf32, #tpu.memory_space<vmem>>, vector<8x128xf32>
    tpu.vector_store %arg4[%c0_12, %c0_13], %33 {strides = array<i32>} : memref<8x128xf32, #tpu.memory_space<vmem>>, vector<8x128xf32>,
    %c0_14 = arith.constant 0 : index
    %c0_15 = arith.constant 0 : index
    %35 = vector.load %arg5[%c0_14, %c0_15] : memref<8x128xf32, #tpu.memory_space<vmem>>, vector<8x128xf32>
    %36 = arith.addf %35, %31 : vector<8x128xf32>
    %c0_16 = arith.constant 0 : index
    %c0_17 = arith.constant 0 : index
    %37 = vector.load %arg5[%c0_16, %c0_17] : memref<8x128xf32, #tpu.memory_space<vmem>>, vector<8x128xf32>
    tpu.vector_store %arg5[%c0_16, %c0_17], %36 {strides = array<i32>} : memref<8x128xf32, #tpu.memory_space<vmem>>, vector<8x128xf32>,
    %c0_i32_18 = arith.constant 0 : i32
    %38 = arith.cmpi eq, %arg0, %c0_i32_18 : i32
    %39 = arith.extui %38 : i1 to i32
    %c0_i32_19 = arith.constant 0 : i32
    %40 = arith.cmpi ne, %39, %c0_i32_19 : i32
    scf.if %40 {
      %c0_20 = arith.constant 0 : index
      %c0_21 = arith.constant 0 : index
      %41 = vector.load %arg4[%c0_20, %c0_21] : memref<8x128xf32, #tpu.memory_space<vmem>>, vector<8x128xf32>
      %42 = vector.shape_cast %41 : vector<8x128xf32> to vector<1x8x128xf32>
      %cst_22 = arith.constant dense<0.000000e+00> : vector<1xf32>
      %43 = vector.multi_reduction <add>, %42, %cst_22 [1, 2] : vector<1x8x128xf32> to vector<1xf32>
      %44 = vector.shape_cast %43 : vector<1xf32> to vector<1x1x1xf32>
      %45 = vector.extract %44[0, 0, 0] : f32 from vector<1x1x1xf32>
      %c0_23 = arith.constant 0 : index
      %c0_24 = arith.constant 0 : index
      %46 = memref.load %arg3[%c0_23, %c0_24] : memref<1x2xf32, #tpu.memory_space<smem>>
      memref.store %45, %arg3[%c0_23, %c0_24] : memref<1x2xf32, #tpu.memory_space<smem>>
      %c0_25 = arith.constant 0 : index
      %c0_26 = arith.constant 0 : index
      %47 = vector.load %arg5[%c0_25, %c0_26] : memref<8x128xf32, #tpu.memory_space<vmem>>, vector<8x128xf32>
      %48 = vector.shape_cast %47 : vector<8x128xf32> to vector<1x8x128xf32>
      %cst_27 = arith.constant dense<0.000000e+00> : vector<1xf32>
      %49 = vector.multi_reduction <add>, %48, %cst_27 [1, 2] : vector<1x8x128xf32> to vector<1xf32>
      %50 = vector.shape_cast %49 : vector<1xf32> to vector<1x1x1xf32>
      %51 = vector.extract %50[0, 0, 0] : f32 from vector<1x1x1xf32>
      %c0_28 = arith.constant 0 : index
      %c1 = arith.constant 1 : index
      %52 = memref.load %arg3[%c0_28, %c1] : memref<1x2xf32, #tpu.memory_space<smem>>
      memref.store %51, %arg3[%c0_28, %c1] : memref<1x2xf32, #tpu.memory_space<smem>>
    } else {
    }
    return
  }
  func.func @transform_0(%arg0: i32) -> (i32, i32) {
    %c0_i32 = arith.constant 0 : i32
    %c0_i32_0 = arith.constant 0 : i32
    return %arg0, %c0_i32 : i32, i32
  }
  func.func @transform_1(%arg0: i32) -> (i32, i32) {
    %c0_i32 = arith.constant 0 : i32
    %c0_i32_0 = arith.constant 0 : i32
    return %arg0, %c0_i32 : i32, i32
  }
  func.func @transform_2(%arg0: i32) -> (i32, i32) {
    %c0_i32 = arith.constant 0 : i32
    %c0_i32_0 = arith.constant 0 : i32
    %c0_i32_1 = arith.constant 0 : i32
    return %c0_i32, %c0_i32_0 : i32, i32
  }
}

</mosaic_0001>

<llo_original>
// kernel: tpu_custom_call.1
$region0: #{tpu_custom_call.1}
  #allocation0 [shape = 'u32[]', space=smem, size = 0x4, offset = 0x4, fixed_abs, tag = 'smem constant byte address 0x4 - core index']
  #allocation1 [shape = 'u32[144,128]{1,0:T(1,128)}', space=vmem, size = 0x12000, scoped, tag = 'internal scratch']
  #allocation2 [shape = 'f32[8,128]{1,0:T(8,128)}', space=vmem, size = 0x1000, scoped, tag = 'scratch operand']
  #allocation3 [shape = 'f32[8,128]{1,0:T(8,128)}', space=vmem, size = 0x1000, scoped, tag = 'scratch operand']
  %s0 = inlined_call_operand.hbm [shape: f32[16,128], index: 0, kind: input, shape index: {}]
  %s1 = inlined_call_operand.hbm [shape: f32[16,128], index: 1, kind: input, shape index: {}]
  %s2 = inlined_call_operand.hbm [shape: f32[1,2], index: 2, kind: output, shape index: {}]
  %s3 = sld [smem:[#allocation0]]
  $region34: #{tpu_custom_call.1} parent=0
    _
  %s5 = ssub.s32 1, %s3
  %s6 = scalar_select 0, %s5, %s3
  $region1: #{tpu_custom_call.1} parent=0
    #allocation4 [shape = 'u8[8192]{0}', space=vmem, size = 0x2000, scoped, tag = 'input window, operand 0, single buffered']
    #allocation5 [shape = 's32[1]{0}', space=sflag, size = 0x4, scoped, tag = 'scoped memory for tpu_custom_call.1']
    #allocation6 [shape = 's32[1]{0}', space=sflag, size = 0x4, scoped, tag = 'scoped memory for tpu_custom_call.1']
    #allocation7 [shape = 'u8[8192]{0}', space=vmem, size = 0x2000, scoped, tag = 'input window, operand 1, single buffered']
    #allocation8 [shape = 's32[1]{0}', space=sflag, size = 0x4, scoped, tag = 'scoped memory for tpu_custom_call.1']
    #allocation9 [shape = 'u8[512]{0}', space=smem, size = 0x200, scoped, tag = 'output window, operand 0, single buffered']
    %7 = vsyncpa [#allocation5], 0
    %8 = vsyncpa [#allocation8], 0
    %9 = vsyncpa [#allocation6], 0
    // Predicated region
    $region2: #{tpu_custom_call.1} parent=1 // pred_check
      _
    $region3: #{tpu_custom_call.1} parent=1 // pred_check_branch
      %11 = sbr.rel (0) target = $region5
    $region4: #{tpu_custom_call.1} parent=1 // pred_region
      %s13 = ssub.s32 256, 256
      %14 = vsyncadd [#allocation5], %s13
      %s15 = sshll.u32 [#allocation4], 4
      %s16 = int_to_ptr.vmem [resolvable:$true] %s15
      %21 = dma.hbm_to_vmem [thread:$0]  %s0, 256, %s16, [#allocation5], 128, 128, 8
    $region5: #{tpu_custom_call.1} parent=1 // pred_fallthru
      _
    // Predicated region
    $region6: #{tpu_custom_call.1} parent=1 // pred_check
      _
    $region7: #{tpu_custom_call.1} parent=1 // pred_check_branch
      %23 = sbr.rel (0) target = $region9
    $region8: #{tpu_custom_call.1} parent=1 // pred_region
      %s25 = ssub.s32 256, 256
      %26 = vsyncadd [#allocation8], %s25
      %s27 = sshll.u32 [#allocation7], 4
      %s28 = int_to_ptr.vmem [resolvable:$true] %s27
      %33 = dma.hbm_to_vmem [thread:$0]  %s1, 256, %s28, [#allocation8], 128, 128, 8
    $region9: #{tpu_custom_call.1} parent=1 // pred_fallthru
      _
    // Predicated region
    $region10: #{tpu_custom_call.1} parent=1 // pred_check
      _
    $region11: #{tpu_custom_call.1} parent=1 // pred_check_branch
      %35 = sbr.rel (0) target = $region13
    $region12: #{tpu_custom_call.1} parent=1 // pred_region
      %36 = dma.done [#allocation5], 256
    $region13: #{tpu_custom_call.1} parent=1 // pred_fallthru
      _
    // Predicated region
    $region14: #{tpu_custom_call.1} parent=1 // pred_check
      _
    $region15: #{tpu_custom_call.1} parent=1 // pred_check_branch
      %38 = sbr.rel (0) target = $region17
    $region16: #{tpu_custom_call.1} parent=1 // pred_region
      %39 = dma.done [#allocation8], 256
    $region17: #{tpu_custom_call.1} parent=1 // pred_fallthru
      _
    %p40 = scmp.eq.s32.totalorder 0, 0
    // Predicated region
    $region18: #{tpu_custom_call.1} parent=1 // pred_check
      %p41 = pneg %p40
    $region19: #{tpu_custom_call.1} parent=1 // pred_check_branch
      %43 = sbr.rel (%p41) target = $region21
    $region20: #{tpu_custom_call.1} parent=1 // pred_region
      %44 = vst [vmem:[#allocation2] sm:$0xff] 0.0
      %45 = vst [vmem:[#allocation3] sm:$0xff] 0.0
    $region21: #{tpu_custom_call.1} parent=1 // pred_fallthru
      _
    %v46 = vld [vmem:[#allocation4] sm:$0xff]
    %v47 = vld [vmem:[#allocation7] sm:$0xff]
    %v48 = vmul.f32 %v46, %v47
    %v49 = vadd.f32 %v48, 0.0
    %v50 = vadd.f32 %v49, 0.0
    %v51 = vadd.f32 %v46, %v47
    %v52 = vadd.f32 %v51, 0.0
    %v53 = vadd.f32 %v52, 0.0
    %s54 = scalar_lea.vmem [#allocation4], 8
    %v55 = vld [vmem:[%s54] sm:$0xff]
    %s56 = scalar_lea.vmem [#allocation7], 8
    %v57 = vld [vmem:[%s56] sm:$0xff]
    %v58 = vmul.f32 %v55, %v57
    %v59 = vadd.f32 %v58, 0.0
    %v60 = vadd.f32 %v50, %v59
    %v61 = vadd.f32 %v55, %v57
    %v62 = vadd.f32 %v61, 0.0
    %v63 = vadd.f32 %v53, %v62
    %v64 = vld [vmem:[#allocation2] sm:$0xff]
    %v65 = vadd.f32 %v64, %v60
    %66 = vst [vmem:[#allocation2] sm:$0xff] %v65
    %v67 = vld [vmem:[#allocation3] sm:$0xff]
    %v68 = vadd.f32 %v67, %v63
    %69 = vst [vmem:[#allocation3] sm:$0xff] %v68
    // Predicated region
    $region22: #{tpu_custom_call.1} parent=1 // pred_check
      %p70 = pneg %p40
    $region23: #{tpu_custom_call.1} parent=1 // pred_check_branch
      %72 = sbr.rel (%p70) target = $region25
    $region24: #{tpu_custom_call.1} parent=1 // pred_region
      %v73 = vld [vmem:[#allocation2] sm:$0xff]
      %74 = vadd.xlane.f32.xlu0 %v73
      %v75 = vpop.xlane.xlu0 %74
      %v76 = vrot.slane %v75, 4
      %v77 = vadd.f32 %v75, %v76
      %v78 = vrot.slane %v77, 2
      %v79 = vadd.f32 %v77, %v78
      %v80 = vrot.slane %v79, 1
      %v81 = vadd.f32 %v79, %v80
      %s82 = vtos %v81
      %s83 = scalar_lea.smem [#allocation9], 0
      %84 = sst [smem:[%s83]] %s82
      %v85 = vld [vmem:[#allocation3] sm:$0xff]
      %86 = vadd.xlane.f32.xlu0 %v85
      %v87 = vpop.xlane.xlu0 %86
      %v88 = vrot.slane %v87, 4
      %v89 = vadd.f32 %v87, %v88
      %v90 = vrot.slane %v89, 2
      %v91 = vadd.f32 %v89, %v90
      %v92 = vrot.slane %v91, 1
      %v93 = vadd.f32 %v91, %v92
      %s94 = vtos %v93
      %s95 = scalar_lea.smem [#allocation9], 1
      %96 = sst [smem:[%s95]] %s94
    $region25: #{tpu_custom_call.1} parent=1 // pred_fallthru
      _
    // Predicated region
    $region26: #{tpu_custom_call.1} parent=1 // pred_check
      _
    $region27: #{tpu_custom_call.1} parent=1 // pred_check_branch
      %98 = sbr.rel (0) target = $region29
    $region28: #{tpu_custom_call.1} parent=1 // pred_region
      %s100 = ssub.s32 16, 16
      %101 = vsyncadd [#allocation6], %s100
      %104 = dma.smem_to_hbm [#allocation9], 16, %s2, [#allocation6]
    $region29: #{tpu_custom_call.1} parent=1 // pred_fallthru
      _
    // Predicated region
    $region30: #{tpu_custom_call.1} parent=1 // pred_check
      _
    $region31: #{tpu_custom_call.1} parent=1 // pred_check_branch
      %106 = sbr.rel (0) target = $region33
    $region32: #{tpu_custom_call.1} parent=1 // pred_region
      %107 = dma.done [#allocation6], 16
    $region33: #{tpu_custom_call.1} parent=1 // pred_fallthru
      _
    %108 = sfence
    %109 = vsyncpa [#allocation5], 1
    %110 = vsyncpa [#allocation8], 1
    %111 = vsyncpa [#allocation6], 1

</llo_original>
